<compile_context>
chip_gen: v7x
topology: tpu7x:2x2x1
jax: 0.10.0
libtpu: 0.0.40
codegen_flags: <defaults>
</compile_context>

<pallas_src>
import jax
import jax.numpy as jnp
from jax.experimental import pallas as pl
from jax.experimental.pallas import tpu as pltpu


def _round_up(x, m):
    return (x + m - 1) // m * m


def _sublane_multiple(dtype):
    itemsize = jnp.dtype(dtype).itemsize
    if itemsize >= 4:
        return 8
    if itemsize == 2:
        return 16
    return 32


def _vmem_limit_bytes():
    # Generation-aware VMEM budget: ~52 MiB on v7x (64 MiB physical per TC),
    # ~100 MiB on v5e/v6e (128 MiB physical).  Conservative fallback otherwise.
    try:
        info = pltpu.get_tpu_info()
        cap = getattr(info, "vmem_capacity_bytes", None)
        if cap is not None:
            if cap <= 64 * 1024 * 1024:
                return 52 * 1024 * 1024
            return 100 * 1024 * 1024
    except Exception:
        pass
    return 48 * 1024 * 1024


def _mlp_kernel_single_k(x_ref, w_ref, b_ref, o_ref):
    # Whole K fits in one tile: no scratch, no accumulator read-modify-write.
    acc = jnp.dot(x_ref[...], w_ref[...], preferred_element_type=jnp.float32)
    # Bias added once; Dropout(p=0.0) == identity.
    o_ref[...] = (acc + b_ref[...].astype(jnp.float32)).astype(o_ref.dtype)


def _mlp_kernel_multi_k(x_ref, w_ref, b_ref, o_ref, acc_ref):
    k = pl.program_id(2)
    partial = jnp.dot(x_ref[...], w_ref[...], preferred_element_type=jnp.float32)

    @pl.when(k == 0)
    def _first():
        # No wasted zero-fill: first K step assigns directly.
        acc_ref[...] = partial

    @pl.when(k > 0)
    def _accumulate():
        acc_ref[...] += partial

    @pl.when(k == pl.num_programs(2) - 1)
    def _finalize():
        # Bias added exactly once; Dropout(p=0.0) == identity.
        o_ref[...] = (acc_ref[...] + b_ref[...].astype(jnp.float32)).astype(o_ref.dtype)


class PallasMlp:
    """Pallas forward for `Mlp`: y = x @ W^T + b ; Dropout(p=0.0) is the identity."""

    def __init__(self, weight, bias, *, compute_dtype=None,
                 tm_hint=512, tn_hint=512, tk_hint=1024):
        w = jnp.asarray(weight)           # (out_features, in_features), nn.Linear layout
        b = jnp.asarray(bias)
        self.out_features, self.in_features = w.shape
        self.compute_dtype = jnp.dtype(compute_dtype) if compute_dtype is not None else w.dtype
        self.tm_hint = tm_hint
        self._vmem_limit = _vmem_limit_bytes()

        K, N = self.in_features, self.out_features
        # Lane-aligned N tile; K tile aligned to 128 (covers f32/bf16 sublane minima too).
        self.tn = min(tn_hint, _round_up(N, 128))
        self.tk = min(tk_hint, _round_up(K, 128))
        self.N_pad = _round_up(N, self.tn)
        self.K_pad = _round_up(K, self.tk)

        # Hoisted out of the per-call hot path: transpose -> (K, N), cast, pad ONCE.
        w_t = w.T.astype(self.compute_dtype)
        if w_t.shape != (self.K_pad, self.N_pad):
            w_t = jnp.pad(w_t, ((0, self.K_pad - K), (0, self.N_pad - N)))
        self.w_t = w_t

        b2d = b.reshape(1, N)
        if self.N_pad != N:
            b2d = jnp.pad(b2d, ((0, 0), (0, self.N_pad - N)))
        self.b = b2d

    def __call__(self, x):
        assert x.shape[-1] == self.in_features
        lead_shape = x.shape[:-1]
        out_dtype = x.dtype

        x2d = x.reshape(-1, self.in_features)
        M, K, N = x2d.shape[0], self.in_features, self.out_features
        K_pad, N_pad, tk = self.K_pad, self.N_pad, self.tk
        tn = self.tn

        # Dtype-aware sublane rounding (8 f32 / 16 bf16 / 32 int8) for both the
        # compute-dtype x tile and the out-dtype output tile.
        sub_m = max(_sublane_multiple(self.compute_dtype), _sublane_multiple(out_dtype))
        tm = min(self.tm_hint, _round_up(M, sub_m))
        M_pad = _round_up(M, tm)

        # v7x has two TensorCores: if the "parallel" (i, j) grid collapsed to a single
        # tile on a reasonably large problem, split N (preferred) or M so both cores work.
        if (M_pad // tm) * (N_pad // tn) < 2:
            if tn >= 256 and (tn // 2) % 128 == 0 and N_pad % (tn // 2) == 0:
                tn //= 2
            elif tm >= 256 and (tm // 2) % sub_m == 0:
                tm //= 2
                M_pad = _round_up(M, tm)

        # Cast / pad x only when actually needed (no gratuitous padded HBM copies).
        x_p = x2d if x2d.dtype == self.compute_dtype else x2d.astype(self.compute_dtype)
        if x_p.shape != (M_pad, K_pad):
            x_p = jnp.pad(x_p, ((0, M_pad - M), (0, K_pad - K)))

        grid_m, grid_n, grid_k = M_pad // tm, N_pad // tn, K_pad // tk

        bytes_accessed = (
            grid_n * M_pad * K_pad * x_p.dtype.itemsize           # X re-read per j tile
            + grid_m * K_pad * N_pad * self.w_t.dtype.itemsize    # W re-read per i tile
            + M_pad * N_pad * jnp.dtype(out_dtype).itemsize
            + N_pad * self.b.dtype.itemsize
        )
        cost = pl.CostEstimate(
            flops=2 * M_pad * K_pad * N_pad,
            transcendentals=0,
            bytes_accessed=bytes_accessed,
        )

        if grid_k == 1:
            # Fast path: K fully resident -> scratch-free kernel, direct store to o_ref.
            cparams = pltpu.CompilerParams(
                dimension_semantics=("parallel", "parallel"),
                vmem_limit_bytes=self._vmem_limit,
            )
            out = pl.pallas_call(
                _mlp_kernel_single_k,
                out_shape=jax.ShapeDtypeStruct((M_pad, N_pad), out_dtype),
                grid_spec=pltpu.PrefetchScalarGridSpec(
                    num_scalar_prefetch=0,
                    grid=(grid_m, grid_n),
                    in_specs=[
                        pl.BlockSpec((tm, tk), lambda i, j: (i, 0)),   # x tile
                        pl.BlockSpec((tk, tn), lambda i, j: (0, j)),   # W^T tile
                        pl.BlockSpec((1, tn), lambda i, j: (0, j)),    # bias tile
                    ],
                    out_specs=pl.BlockSpec((tm, tn), lambda i, j: (i, j)),
                ),
                compiler_params=cparams,
                cost_estimate=cost,
            )(x_p, self.w_t, self.b)
        else:
            cparams = pltpu.CompilerParams(
                dimension_semantics=("parallel", "parallel", "arbitrary"),
                vmem_limit_bytes=self._vmem_limit,
            )
            out = pl.pallas_call(
                _mlp_kernel_multi_k,
                out_shape=jax.ShapeDtypeStruct((M_pad, N_pad), out_dtype),
                grid_spec=pltpu.PrefetchScalarGridSpec(
                    num_scalar_prefetch=0,
                    grid=(grid_m, grid_n, grid_k),
                    in_specs=[
                        pl.BlockSpec((tm, tk), lambda i, j, k: (i, k)),   # x tile
                        pl.BlockSpec((tk, tn), lambda i, j, k: (k, j)),   # W^T tile
                        pl.BlockSpec((1, tn), lambda i, j, k: (0, j)),    # bias tile
                    ],
                    out_specs=pl.BlockSpec((tm, tn), lambda i, j, k: (i, j)),
                    scratch_shapes=[pltpu.VMEM((tm, tn), jnp.float32)],
                ),
                compiler_params=cparams,
                cost_estimate=cost,
            )(x_p, self.w_t, self.b)

        out = out[:M, :N]
        return out.reshape(*lead_shape, self.out_features)


if __name__ == "__main__":
    key = jax.random.PRNGKey(0)
    k_x, k_w, k_b = jax.random.split(key, 3)

    # Small shapes consistent with the module's forward.
    batch, seq, in_features, out_features = 2, 8, 32, 64

    x = jax.random.normal(k_x, (batch, seq, in_features), dtype=jnp.float32)
    weight = jax.random.normal(k_w, (out_features, in_features), dtype=jnp.float32) * 0.02
    bias = jax.random.normal(k_b, (out_features,), dtype=jnp.float32) * 0.01

    y_ref = jnp.einsum("bsk,nk->bsn", x, weight) + bias

    # 1) Exact f32 path (matches the PyTorch module's numerics); single-K fast path.
    mlp_f32 = PallasMlp(weight, bias)                       # compute_dtype defaults to f32
    y = mlp_f32(x)
    jax.block_until_ready(y)
    assert y.shape == (batch, seq, out_features)
    assert jnp.allclose(y, y_ref, atol=1e-4, rtol=1e-4)

    # 2) bf16-operand path (f32 accumulation, f32 output) — full-rate MXU lever.
    mlp_bf16 = PallasMlp(weight, bias, compute_dtype=jnp.bfloat16)
    y_bf16 = mlp_bf16(x)
    jax.block_until_ready(y_bf16)
    assert jnp.allclose(y_bf16, y_ref, atol=5e-2, rtol=5e-2)

    # 3) Multi-K accumulator path (K split across grid steps) on a slightly larger K.
    in2, out2 = 256, 128
    x2 = jax.random.normal(k_x, (batch, seq, in2), dtype=jnp.float32)
    w2 = jax.random.normal(k_w, (out2, in2), dtype=jnp.float32) * 0.02
    b2 = jax.random.normal(k_b, (out2,), dtype=jnp.float32) * 0.01
    mlp_multi_k = PallasMlp(w2, b2, tk_hint=128)            # forces K_pad // tk == 2
    y2 = mlp_multi_k(x2)
    jax.block_until_ready(y2)
    y2_ref = jnp.einsum("bsk,nk->bsn", x2, w2) + b2
    assert jnp.allclose(y2, y2_ref, atol=1e-4, rtol=1e-4)

    print("KERNEL_OK")
</pallas_src>

<mosaic_0001>
module attributes {stable_mosaic.version = 11 : i64} {
  func.func @_mlp_kernel_single_k(%arg0: i32, %arg1: i32, %arg2: memref<16x128xf32, #tpu.memory_space<vmem>>, %arg3: memref<128x128xf32, #tpu.memory_space<vmem>>, %arg4: memref<1x128xf32, #tpu.memory_space<vmem>>, %arg5: memref<16x128xf32, #tpu.memory_space<vmem>>) attributes {dimension_semantics = [#tpu.dimension_semantics<parallel>, #tpu.dimension_semantics<parallel>], iteration_bounds = array<i64: 1, 1>, scalar_prefetch = 0 : i64, scratch_operands = 0 : i64, tpu.core_type = #tpu.core_type<tc>, window_params = [{transform_indices = @transform_0, window_bounds = array<i64: 16, 128>}, {transform_indices = @transform_1, window_bounds = array<i64: 128, 128>}, {transform_indices = @transform_2, window_bounds = array<i64: 1, 128>}, {transform_indices = @transform_3, window_bounds = array<i64: 16, 128>}]} {
    %c0 = arith.constant 0 : index
    %c0_0 = arith.constant 0 : index
    %0 = vector.load %arg2[%c0, %c0_0] : memref<16x128xf32, #tpu.memory_space<vmem>>, vector<16x128xf32>
    %c0_1 = arith.constant 0 : index
    %c0_2 = arith.constant 0 : index
    %1 = vector.load %arg3[%c0_1, %c0_2] : memref<128x128xf32, #tpu.memory_space<vmem>>, vector<128x128xf32>
    %cst = arith.constant dense<0.000000e+00> : vector<16x128xf32>
    %2 = tpu.matmul %0, %1, %cst {dimension_numbers = #tpu.dot_dimension_numbers<[1], [0], [0], [1], [0, 0, 1, 1], [], []>} : vector<16x128xf32>, vector<128x128xf32>, vector<16x128xf32> -> vector<16x128xf32>
    %c0_3 = arith.constant 0 : index
    %c0_4 = arith.constant 0 : index
    %3 = vector.load %arg4[%c0_3, %c0_4] : memref<1x128xf32, #tpu.memory_space<vmem>>, vector<1x128xf32>
    %4 = vector.broadcast %3 : vector<1x128xf32> to vector<16x128xf32>
    %5 = arith.addf %2, %4 : vector<16x128xf32>
    %c0_5 = arith.constant 0 : index
    %c0_6 = arith.constant 0 : index
    %6 = vector.load %arg5[%c0_5, %c0_6] : memref<16x128xf32, #tpu.memory_space<vmem>>, vector<16x128xf32>
    tpu.vector_store %arg5[%c0_5, %c0_6], %5 {strides = array<i32>} : memref<16x128xf32, #tpu.memory_space<vmem>>, vector<16x128xf32>,
    return
  }
  func.func @transform_0(%arg0: i32, %arg1: i32) -> (i32, i32) {
    %c0_i32 = arith.constant 0 : i32
    %c0_i32_0 = arith.constant 0 : i32
    return %arg0, %c0_i32 : i32, i32
  }
  func.func @transform_1(%arg0: i32, %arg1: i32) -> (i32, i32) {
    %c0_i32 = arith.constant 0 : i32
    %c0_i32_0 = arith.constant 0 : i32
    return %c0_i32, %arg1 : i32, i32
  }
  func.func @transform_2(%arg0: i32, %arg1: i32) -> (i32, i32) {
    %c0_i32 = arith.constant 0 : i32
    %c0_i32_0 = arith.constant 0 : i32
    return %c0_i32, %arg1 : i32, i32
  }
  func.func @transform_3(%arg0: i32, %arg1: i32) -> (i32, i32) {
    %c0_i32 = arith.constant 0 : i32
    return %arg0, %arg1 : i32, i32
  }
}

</mosaic_0001>

<llo_original>
// kernel: tpu_custom_call.1
$region0: #{tpu_custom_call.1}
  #allocation0 [shape = 'u32[]', space=smem, size = 0x4, offset = 0x4, fixed_abs, tag = 'smem constant byte address 0x4 - core index']
  #allocation1 [shape = 'u32[144,128]{1,0:T(1,128)}', space=vmem, size = 0x12000, scoped, tag = 'internal scratch']
  %s0 = inlined_call_operand.hbm [shape: f32[16,128], index: 0, kind: input, shape index: {}]
  %s1 = inlined_call_operand.hbm [shape: f32[128,128], index: 1, kind: input, shape index: {}]
  %s2 = inlined_call_operand.vmem [shape: f32[1,128], index: 2, kind: input, shape index: {}]
  %s3 = inlined_call_operand.hbm [shape: f32[16,128], index: 3, kind: output, shape index: {}]
  %s4 = sld [smem:[#allocation0]]
  $region30: #{tpu_custom_call.1} parent=0
    _
  %s6 = ssub.s32 1, %s4
  %s7 = scalar_select 0, %s6, %s4
  $region1: #{tpu_custom_call.1} parent=0
    #allocation2 [shape = 'u8[8192]{0}', space=vmem, size = 0x2000, scoped, tag = 'input window, operand 0, single buffered']
    #allocation3 [shape = 's32[1]{0}', space=sflag, size = 0x4, scoped, tag = 'scoped memory for tpu_custom_call.1']
    #allocation4 [shape = 's32[1]{0}', space=sflag, size = 0x4, scoped, tag = 'scoped memory for tpu_custom_call.1']
    #allocation5 [shape = 'u8[65536]{0}', space=vmem, size = 0x10000, scoped, tag = 'input window, operand 1, single buffered']
    #allocation6 [shape = 's32[1]{0}', space=sflag, size = 0x4, scoped, tag = 'scoped memory for tpu_custom_call.1']
    #allocation7 [shape = 'u8[8192]{0}', space=vmem, size = 0x2000, scoped, tag = 'output window, operand 0, single buffered']
    %8 = vsyncpa [#allocation3], 0
    %9 = vsyncpa [#allocation6], 0
    %10 = vsyncpa [#allocation4], 0
    // Predicated region
    $region2: #{tpu_custom_call.1} parent=1 // pred_check
      _
    $region3: #{tpu_custom_call.1} parent=1 // pred_check_branch
      %12 = sbr.rel (0) target = $region5
    $region4: #{tpu_custom_call.1} parent=1 // pred_region
      %s14 = ssub.s32 256, 256
      %15 = vsyncadd [#allocation3], %s14
      %s16 = sshll.u32 [#allocation2], 4
      %s17 = int_to_ptr.vmem [resolvable:$true] %s16
      %22 = dma.hbm_to_vmem [thread:$0]  %s0, 256, %s17, [#allocation3], 128, 128, 8
    $region5: #{tpu_custom_call.1} parent=1 // pred_fallthru
      _
    // Predicated region
    $region6: #{tpu_custom_call.1} parent=1 // pred_check
      _
    $region7: #{tpu_custom_call.1} parent=1 // pred_check_branch
      %24 = sbr.rel (0) target = $region9
    $region8: #{tpu_custom_call.1} parent=1 // pred_region
      %s26 = ssub.s32 2048, 2048
      %27 = vsyncadd [#allocation6], %s26
      %s28 = sshll.u32 [#allocation5], 4
      %s29 = int_to_ptr.vmem [resolvable:$true] %s28
      %34 = dma.hbm_to_vmem [thread:$0]  %s1, 2048, %s29, [#allocation6], 128, 128, 8
    $region9: #{tpu_custom_call.1} parent=1 // pred_fallthru
      _
    // Predicated region
    $region10: #{tpu_custom_call.1} parent=1 // pred_check
      _
    $region11: #{tpu_custom_call.1} parent=1 // pred_check_branch
      %36 = sbr.rel (0) target = $region13
    $region12: #{tpu_custom_call.1} parent=1 // pred_region
      _
    $region13: #{tpu_custom_call.1} parent=1 // pred_fallthru
      _
    // Predicated region
    $region14: #{tpu_custom_call.1} parent=1 // pred_check
      _
    $region15: #{tpu_custom_call.1} parent=1 // pred_check_branch
      %38 = sbr.rel (0) target = $region17
    $region16: #{tpu_custom_call.1} parent=1 // pred_region
      %39 = dma.done [#allocation3], 256
    $region17: #{tpu_custom_call.1} parent=1 // pred_fallthru
      _
    // Predicated region
    $region18: #{tpu_custom_call.1} parent=1 // pred_check
      _
    $region19: #{tpu_custom_call.1} parent=1 // pred_check_branch
      %41 = sbr.rel (0) target = $region21
    $region20: #{tpu_custom_call.1} parent=1 // pred_region
      %42 = dma.done [#allocation6], 2048
    $region21: #{tpu_custom_call.1} parent=1 // pred_fallthru
      _
    %v43 = vld [vmem:[#allocation2] sm:$0xff]
    %v44 = vld [vmem:[#allocation2 + $0x8] sm:$0xff]
    %v45 = vld [vmem:[#allocation5] sm:$0xff]
    %v46 = vld [vmem:[#allocation5 + $0x8] sm:$0xff]
    %v47 = vld [vmem:[#allocation5 + $0x10] sm:$0xff]
    %v48 = vld [vmem:[#allocation5 + $0x18] sm:$0xff]
    %v49 = vld [vmem:[#allocation5 + $0x20] sm:$0xff]
    %v50 = vld [vmem:[#allocation5 + $0x28] sm:$0xff]
    %v51 = vld [vmem:[#allocation5 + $0x30] sm:$0xff]
    %v52 = vld [vmem:[#allocation5 + $0x38] sm:$0xff]
    %v53 = vld [vmem:[#allocation5 + $0x40] sm:$0xff]
    %v54 = vld [vmem:[#allocation5 + $0x48] sm:$0xff]
    %v55 = vld [vmem:[#allocation5 + $0x50] sm:$0xff]
    %v56 = vld [vmem:[#allocation5 + $0x58] sm:$0xff]
    %v57 = vld [vmem:[#allocation5 + $0x60] sm:$0xff]
    %v58 = vld [vmem:[#allocation5 + $0x68] sm:$0xff]
    %v59 = vld [vmem:[#allocation5 + $0x70] sm:$0xff]
    %v60 = vld [vmem:[#allocation5 + $0x78] sm:$0xff]
    %v61 = vld [vmem:[%s2] sm:$0x1]
    %v63 = vlaneseq
    %v64 = vshrl.u32 %v63, 7
    %v65 = vsub.s32 0, %v64
    %v66 = vrot.slane %v61, %v65
    %68 = vmatprep.subr.mxu0 0.0
    %69 = vmatpush1.msra.mxu0 %v45
    %70 = vmatprep.subr.mxu0 0.0
    %71 = vmatpush1.msra.mxu0 %v46
    %72 = vmatprep.subr.mxu0 0.0
    %73 = vmatpush1.msra.mxu0 %v47
    %74 = vmatprep.subr.mxu0 0.0
    %75 = vmatpush1.msra.mxu0 %v48
    %76 = vmatprep.subr.mxu0 0.0
    %77 = vmatpush1.msra.mxu0 %v49
    %78 = vmatprep.subr.mxu0 0.0
    %79 = vmatpush1.msra.mxu0 %v50
    %80 = vmatprep.subr.mxu0 0.0
    %81 = vmatpush1.msra.mxu0 %v51
    %82 = vmatprep.subr.mxu0 0.0
    %83 = vmatpush1.msra.mxu0 %v52
    %84 = vmatprep.subr.mxu0 0.0
    %85 = vmatpush1.msra.mxu0 %v53
    %86 = vmatprep.subr.mxu0 0.0
    %87 = vmatpush1.msra.mxu0 %v54
    %88 = vmatprep.subr.mxu0 0.0
    %89 = vmatpush1.msra.mxu0 %v55
    %90 = vmatprep.subr.mxu0 0.0
    %91 = vmatpush1.msra.mxu0 %v56
    %92 = vmatprep.subr.mxu0 0.0
    %93 = vmatpush1.msra.mxu0 %v57
    %94 = vmatprep.subr.mxu0 0.0
    %95 = vmatpush1.msra.mxu0 %v58
    %96 = vmatprep.subr.mxu0 0.0
    %97 = vmatpush1.msra.mxu0 %v59
    %98 = vmatprep.subr.mxu0 0.0
    %99 = vmatpush1.msra.mxu0 %v60
    %100 = vmatprep.subr.mxu0 0.0
    %101 = vmatpush1.msra.mxu0 0.0
    %102 = vmatprep.subr.mxu0 0.0
    %103 = vmatpush1.msra.mxu0 0.0
    %104 = vmatprep.subr.mxu0 0.0
    %105 = vmatpush1.msra.mxu0 0.0
    %106 = vmatprep.subr.mxu0 0.0
    %107 = vmatpush1.msra.mxu0 0.0
    %108 = vmatprep.subr.mxu0 0.0
    %109 = vmatpush1.msra.mxu0 0.0
    %110 = vmatprep.subr.mxu0 0.0
    %111 = vmatpush1.msra.mxu0 0.0
    %112 = vmatprep.subr.mxu0 0.0
    %113 = vmatpush1.msra.mxu0 0.0
    %114 = vmatprep.subr.mxu0 0.0
    %115 = vmatpush1.msra.mxu0 0.0
    %116 = vmatprep.subr.mxu0 0.0
    %117 = vmatpush1.msra.mxu0 0.0
    %118 = vmatprep.subr.mxu0 0.0
    %119 = vmatpush1.msra.mxu0 0.0
    %120 = vmatprep.subr.mxu0 0.0
    %121 = vmatpush1.msra.mxu0 0.0
    %122 = vmatprep.subr.mxu0 0.0
    %123 = vmatpush1.msra.mxu0 0.0
    %124 = vmatprep.subr.mxu0 0.0
    %125 = vmatpush1.msra.mxu0 0.0
    %126 = vmatprep.subr.mxu0 0.0
    %127 = vmatpush1.msra.mxu0 0.0
    %128 = vmatprep.subr.mxu0 0.0
    %129 = vmatpush1.msra.mxu0 0.0
    %130 = vmatprep.subr.mxu0 0.0
    %131 = vmatpush1.msra.mxu0 0.0
    %132 = vmatprep.mubr.f32.mxu0 0.0
    %133 = vmatmul.mubr.f32.gmra.mrb[0].mxu0 %v43
    %v134 = vpop.f32.mrb[0].mxu0
    %v135 = vadd.f32 %v66, %v134
    %v136 = vpop.f32.mrb[0].mxu0
    %137 = vmatprep.mubr.f32.mxu0 0.0
    %138 = vmatmul.mubr.f32.gmra.mrb[0].mxu0 %v44
    %v139 = vpop.f32.mrb[0].mxu0
    %v140 = vadd.f32 %v66, %v139
    %v141 = vpop.f32.mrb[0].mxu0
    %142 = vdwg.mxu0
    %143 = vst [vmem:[#allocation7] sm:$0xff] %v135
    %144 = vst [vmem:[#allocation7 + $0x8] sm:$0xff] %v140
    // Predicated region
    $region22: #{tpu_custom_call.1} parent=1 // pred_check
      _
    $region23: #{tpu_custom_call.1} parent=1 // pred_check_branch
      %146 = sbr.rel (0) target = $region25
    $region24: #{tpu_custom_call.1} parent=1 // pred_region
      %s148 = ssub.s32 256, 256
      %149 = vsyncadd [#allocation4], %s148
      %s150 = sshll.u32 [#allocation7], 4
      %s151 = int_to_ptr.vmem [resolvable:$true] %s150
      %156 = dma.vmem_to_hbm [thread:$0]  %s151, 256, %s3, [#allocation4], 128, 128, 8
    $region25: #{tpu_custom_call.1} parent=1 // pred_fallthru
      _
    // Predicated region
    $region26: #{tpu_custom_call.1} parent=1 // pred_check
      _
    $region27: #{tpu_custom_call.1} parent=1 // pred_check_branch
      %158 = sbr.rel (0) target = $region29
    $region28: #{tpu_custom_call.1} parent=1 // pred_region
      %159 = dma.done [#allocation4], 256
    $region29: #{tpu_custom_call.1} parent=1 // pred_fallthru
      _
    %160 = vsyncpa [#allocation3], 1
    %161 = vsyncpa [#allocation6], 1
    %162 = vsyncpa [#allocation4], 1

</llo_original>
